<compile_context>
chip_gen: v6e
topology: v6e:2x2x1
jax: 0.10.0
libtpu: 0.0.40
codegen_flags: <defaults>
</compile_context>

<pallas_src>
import jax
import jax.numpy as jnp
from jax.experimental import pallas as pl
from jax.experimental.pallas import tpu as pltpu


# Dimensions implied by the surgically modified model.
D_IN, D_HID, D_MID, D_FC2, D_OUT = 32, 64, 64, 32, 16


def _surgery_mlp_kernel(x_ref, w1_ref, wc_ref, b1_ref, bc_ref, o_ref):
    # fc1 + ReLU: cast f32 activations to bf16 right before the MXU push
    # (VPU has huge slack here); accumulation / bias add / ReLU stay f32.
    x = x_ref[...].astype(jnp.bfloat16)
    h = jnp.dot(x, w1_ref[...], preferred_element_type=jnp.float32) + b1_ref[...]
    h = jnp.maximum(h, 0.0).astype(jnp.bfloat16)

    # mid -> fc2 -> head collapsed into one 64 -> 16 affine (valid because there
    # is no nonlinearity between them); f32 bias add, cast to output dtype.
    o = jnp.dot(h, wc_ref[...], preferred_element_type=jnp.float32) + bc_ref[...]
    o_ref[...] = o.astype(o_ref.dtype)


def _collapse_params(params):
    """Fold mid/fc2/head (no nonlinearity between them) into one affine (f32)."""
    (w1, b1), (wm, bm), (w2, b2), (wh, bh) = params
    wc = wm @ w2 @ wh                     # [64, 16]
    bc = (bm @ w2 + b2) @ wh + bh         # [1, 16]
    return w1, b1, wc, bc


def _round_up(x, m):
    return (x + m - 1) // m * m


def surgery_model_forward(x, params, *, batch_tile=8192, out_dtype=jnp.bfloat16):
    """Sequential forward of the surgically modified model
    (x -> fc1 -> ReLU -> mid -> fc2 -> head) fused into one Pallas kernel."""
    w1, b1, wc, bc = _collapse_params(params)
    w1 = w1.astype(jnp.bfloat16)          # MXU-native weights
    wc = wc.astype(jnp.bfloat16)
    b1 = b1.astype(jnp.float32)           # biases stay f32 (no avoidable rounding)
    bc = bc.astype(jnp.float32)

    batch = x.shape[0]
    # Large batch tiles: per-grid-step overhead (~0.35us) dwarfs the tiny DMA at
    # small tiles.  Clamp so the grid keeps >= 2 steps when the batch allows
    # (v7x megacore), and so the tile never exceeds the (8-aligned) batch.
    tb = min(batch_tile, _round_up(pl.cdiv(batch, 2), 16))
    tb = max(8, min(tb, _round_up(batch, 8)))
    grid = pl.cdiv(batch, tb)             # ragged tail = masked edge block; no jnp.pad

    out_bytes = jnp.dtype(out_dtype).itemsize
    flops = 2 * batch * (D_IN * D_HID + D_MID * D_OUT)
    bytes_accessed = (batch * D_IN * x.dtype.itemsize
                      + batch * D_OUT * out_bytes
                      + w1.size * 2 + wc.size * 2 + b1.size * 4 + bc.size * 4)

    return pl.pallas_call(
        _surgery_mlp_kernel,
        out_shape=jax.ShapeDtypeStruct((batch, D_OUT), out_dtype),
        grid=(grid,),
        in_specs=[
            # Batch-tiled activations (cast to bf16 inside the kernel).
            pl.BlockSpec((tb, D_IN), lambda i: (i, 0)),
            # Parameters: resident across all batch tiles (DMA'd once).
            pl.BlockSpec((D_IN, D_HID), lambda i: (0, 0)),    # W1  bf16 [32, 64]
            pl.BlockSpec((D_MID, D_OUT), lambda i: (0, 0)),   # Wc  bf16 [64, 16]
            pl.BlockSpec((1, D_HID), lambda i: (0, 0)),       # b1  f32  [1, 64]
            pl.BlockSpec((1, D_OUT), lambda i: (0, 0)),       # bc  f32  [1, 16]
        ],
        out_specs=pl.BlockSpec((tb, D_OUT), lambda i: (i, 0)),
        compiler_params=pltpu.CompilerParams(
            dimension_semantics=("parallel",)),
        cost_estimate=pl.CostEstimate(
            flops=flops, transcendentals=0, bytes_accessed=bytes_accessed),
    )(x, w1, wc, b1, bc)


def _init_linear(key, in_f, out_f):
    """Deterministic Linear init; weight stored as [in, out], bias as [1, out]."""
    kw, kb = jax.random.split(key)
    scale = 1.0 / jnp.sqrt(jnp.float32(in_f))
    w = jax.random.uniform(kw, (in_f, out_f), jnp.float32, -scale, scale)
    b = jax.random.uniform(kb, (1, out_f), jnp.float32, -scale, scale)
    return w, b


def _reference_f32(x, params):
    """Plain-JAX f32 reference of the original (uncollapsed) sequential forward."""
    (w1, b1), (wm, bm), (w2, b2), (wh, bh) = params
    h = jnp.maximum(x @ w1 + b1, 0.0)
    h = h @ wm + bm
    h = h @ w2 + b2
    return h @ wh + bh


def _reference_mirror(x, params, out_dtype=jnp.bfloat16):
    """Plain-JAX mirror of the kernel's exact arithmetic (f32 collapse, bf16 MXU
    inputs, f32 bias add / ReLU, bf16 output)."""
    w1, b1, wc, bc = _collapse_params(params)
    h = jnp.dot(x.astype(jnp.bfloat16), w1.astype(jnp.bfloat16),
                preferred_element_type=jnp.float32) + b1
    h = jnp.maximum(h, 0.0).astype(jnp.bfloat16)
    o = jnp.dot(h, wc.astype(jnp.bfloat16),
                preferred_element_type=jnp.float32) + bc
    return o.astype(out_dtype)


if __name__ == "__main__":
    key = jax.random.PRNGKey(0)
    k_x, k1, k2, k3, k4, k_x2 = jax.random.split(key, 6)

    params = (
        _init_linear(k1, D_IN, D_HID),     # fc1  (base model)
        _init_linear(k2, D_HID, D_MID),    # mid  (inserted before fc2)
        _init_linear(k3, D_MID, D_FC2),    # fc2  (replacement)
        _init_linear(k4, D_FC2, D_OUT),    # head (appended)
    )

    # --- small, spec-sized example -----------------------------------------
    batch = 8
    x = jax.random.normal(k_x, (batch, D_IN), jnp.float32)

    out = jax.block_until_ready(surgery_model_forward(x, params))
    assert out.shape == (batch, D_OUT), out.shape
    assert out.dtype == jnp.bfloat16, out.dtype

    ref_exact = _reference_mirror(x, params)
    assert jnp.allclose(out.astype(jnp.float32), ref_exact.astype(jnp.float32),
                        atol=1e-2, rtol=1e-2), "mismatch vs bf16 mirror reference"

    ref_f32 = _reference_f32(x, params)
    assert jnp.allclose(out.astype(jnp.float32), ref_f32,
                        atol=3e-2, rtol=3e-2), "mismatch vs f32 reference"

    # --- larger, ragged batch: exercises grid >= 2 (v7x megacore path) and the
    #     masked edge block (no jnp.pad pre-pass). ----------------------------
    batch2 = 1000
    x2 = jax.random.normal(k_x2, (batch2, D_IN), jnp.float32)
    out2 = jax.block_until_ready(surgery_model_forward(x2, params))
    assert out2.shape == (batch2, D_OUT), out2.shape
    ref2 = _reference_mirror(x2, params)
    assert jnp.allclose(out2.astype(jnp.float32), ref2.astype(jnp.float32),
                        atol=1e-2, rtol=1e-2), "mismatch on ragged batch"

    print("KERNEL_OK")
</pallas_src>

<mosaic_0001>
module attributes {stable_mosaic.version = 11 : i64} {
  func.func @_surgery_mlp_kernel(%arg0: i32, %arg1: memref<8x32xf32, #tpu.memory_space<vmem>>, %arg2: memref<32x64xbf16, #tpu.memory_space<vmem>>, %arg3: memref<64x16xbf16, #tpu.memory_space<vmem>>, %arg4: memref<1x64xf32, #tpu.memory_space<vmem>>, %arg5: memref<1x16xf32, #tpu.memory_space<vmem>>, %arg6: memref<8x16xbf16, #tpu.memory_space<vmem>>) attributes {dimension_semantics = [#tpu.dimension_semantics<parallel>], iteration_bounds = array<i64: 1>, scalar_prefetch = 0 : i64, scratch_operands = 0 : i64, tpu.core_type = #tpu.core_type<tc>, window_params = [{transform_indices = @transform_0, window_bounds = array<i64: 8, 32>}, {pipeline_mode = #tpu.pipeline_mode<synchronous>, transform_indices = @transform_1, window_bounds = array<i64: 32, 64>}, {pipeline_mode = #tpu.pipeline_mode<synchronous>, transform_indices = @transform_2, window_bounds = array<i64: 64, 16>}, {pipeline_mode = #tpu.pipeline_mode<synchronous>, transform_indices = @transform_3, window_bounds = array<i64: 1, 64>}, {pipeline_mode = #tpu.pipeline_mode<synchronous>, transform_indices = @transform_4, window_bounds = array<i64: 1, 16>}, {transform_indices = @transform_5, window_bounds = array<i64: 8, 16>}]} {
    %c0 = arith.constant 0 : index
    %c0_0 = arith.constant 0 : index
    %0 = vector.load %arg1[%c0, %c0_0] : memref<8x32xf32, #tpu.memory_space<vmem>>, vector<8x32xf32>
    %1 = arith.truncf %0 : vector<8x32xf32> to vector<8x32xbf16>
    %c0_1 = arith.constant 0 : index
    %c0_2 = arith.constant 0 : index
    %2 = vector.load %arg2[%c0_1, %c0_2] : memref<32x64xbf16, #tpu.memory_space<vmem>>, vector<32x64xbf16>
    %cst = arith.constant dense<0.000000e+00> : vector<8x64xf32>
    %3 = tpu.matmul %1, %2, %cst {dimension_numbers = #tpu.dot_dimension_numbers<[1], [0], [0], [1], [0, 0, 1, 1], [], []>} : vector<8x32xbf16>, vector<32x64xbf16>, vector<8x64xf32> -> vector<8x64xf32>
    %c0_3 = arith.constant 0 : index
    %c0_4 = arith.constant 0 : index
    %4 = vector.load %arg4[%c0_3, %c0_4] : memref<1x64xf32, #tpu.memory_space<vmem>>, vector<1x64xf32>
    %5 = vector.broadcast %4 : vector<1x64xf32> to vector<8x64xf32>
    %6 = arith.addf %3, %5 : vector<8x64xf32>
    %cst_5 = arith.constant 0.000000e+00 : f32
    %7 = vector.broadcast %cst_5 : f32 to vector<8x64xf32>
    %8 = arith.maximumf %6, %7 : vector<8x64xf32>
    %9 = arith.truncf %8 : vector<8x64xf32> to vector<8x64xbf16>
    %c0_6 = arith.constant 0 : index
    %c0_7 = arith.constant 0 : index
    %10 = vector.load %arg3[%c0_6, %c0_7] : memref<64x16xbf16, #tpu.memory_space<vmem>>, vector<64x16xbf16>
    %cst_8 = arith.constant dense<0.000000e+00> : vector<8x16xf32>
    %11 = tpu.matmul %9, %10, %cst_8 {dimension_numbers = #tpu.dot_dimension_numbers<[1], [0], [0], [1], [0, 0, 1, 1], [], []>} : vector<8x64xbf16>, vector<64x16xbf16>, vector<8x16xf32> -> vector<8x16xf32>
    %c0_9 = arith.constant 0 : index
    %c0_10 = arith.constant 0 : index
    %12 = vector.load %arg5[%c0_9, %c0_10] : memref<1x16xf32, #tpu.memory_space<vmem>>, vector<1x16xf32>
    %13 = vector.broadcast %12 : vector<1x16xf32> to vector<8x16xf32>
    %14 = arith.addf %11, %13 : vector<8x16xf32>
    %15 = arith.truncf %14 : vector<8x16xf32> to vector<8x16xbf16>
    %c0_11 = arith.constant 0 : index
    %c0_12 = arith.constant 0 : index
    %16 = vector.load %arg6[%c0_11, %c0_12] : memref<8x16xbf16, #tpu.memory_space<vmem>>, vector<8x16xbf16>
    tpu.vector_store %arg6[%c0_11, %c0_12], %15 {strides = array<i32>} : memref<8x16xbf16, #tpu.memory_space<vmem>>, vector<8x16xbf16>,
    return
  }
  func.func @transform_0(%arg0: i32) -> (i32, i32) {
    %c0_i32 = arith.constant 0 : i32
    %c0_i32_0 = arith.constant 0 : i32
    return %arg0, %c0_i32 : i32, i32
  }
  func.func @transform_1(%arg0: i32) -> (i32, i32) {
    %c0_i32 = arith.constant 0 : i32
    %c0_i32_0 = arith.constant 0 : i32
    %c0_i32_1 = arith.constant 0 : i32
    return %c0_i32, %c0_i32_0 : i32, i32
  }
  func.func @transform_2(%arg0: i32) -> (i32, i32) {
    %c0_i32 = arith.constant 0 : i32
    %c0_i32_0 = arith.constant 0 : i32
    %c0_i32_1 = arith.constant 0 : i32
    return %c0_i32, %c0_i32_0 : i32, i32
  }
  func.func @transform_3(%arg0: i32) -> (i32, i32) {
    %c0_i32 = arith.constant 0 : i32
    %c0_i32_0 = arith.constant 0 : i32
    %c0_i32_1 = arith.constant 0 : i32
    return %c0_i32, %c0_i32_0 : i32, i32
  }
  func.func @transform_4(%arg0: i32) -> (i32, i32) {
    %c0_i32 = arith.constant 0 : i32
    %c0_i32_0 = arith.constant 0 : i32
    %c0_i32_1 = arith.constant 0 : i32
    return %c0_i32, %c0_i32_0 : i32, i32
  }
  func.func @transform_5(%arg0: i32) -> (i32, i32) {
    %c0_i32 = arith.constant 0 : i32
    %c0_i32_0 = arith.constant 0 : i32
    return %arg0, %c0_i32 : i32, i32
  }
}

</mosaic_0001>

<llo_original>
// kernel: tpu_custom_call.1
$region0: #{tpu_custom_call.1}
  #allocation0 [shape = 'u32[]', space=smem, size = 0x4, offset = 0x4, fixed_abs, tag = 'smem constant byte address 0x4 - core index']
  #allocation1 [shape = 'u32[144,128]{1,0:T(1,128)}', space=vmem, size = 0x12000, scoped, tag = 'internal scratch']
  %s0 = inlined_call_operand.vmem [shape: f32[8,32], index: 0, kind: input, shape index: {}]
  %s1 = inlined_call_operand.vmem [shape: bf16[32,64], index: 1, kind: input, shape index: {}]
  %s2 = inlined_call_operand.vmem [shape: bf16[64,16], index: 2, kind: input, shape index: {}]
  %s3 = inlined_call_operand.vmem [shape: f32[1,64], index: 3, kind: input, shape index: {}]
  %s4 = inlined_call_operand.vmem [shape: f32[1,16], index: 4, kind: input, shape index: {}]
  %s5 = inlined_call_operand.hbm [shape: bf16[8,16], index: 5, kind: output, shape index: {}]
  %s6 = sld [smem:[#allocation0]]
  $region30: #{tpu_custom_call.1} parent=0
    _
  %s8 = ssub.s32 1, %s6
  %s9 = scalar_select 0, %s8, %s6
  $region1: #{tpu_custom_call.1} parent=0
    #allocation2 [shape = 'u8[2048]{0}', space=vmem, size = 0x800, scoped, tag = 'output window, operand 0, single buffered']
    #allocation3 [shape = 's32[1]{0}', space=sflag, size = 0x4, scoped, tag = 'scoped memory for tpu_custom_call.1']
    %10 = vsyncpa [#allocation3], 0
    // Predicated region
    $region2: #{tpu_custom_call.1} parent=1 // pred_check
      _
    $region3: #{tpu_custom_call.1} parent=1 // pred_check_branch
      %12 = sbr.rel (0) target = $region5
    $region4: #{tpu_custom_call.1} parent=1 // pred_region
      _
    $region5: #{tpu_custom_call.1} parent=1 // pred_fallthru
      _
    // Predicated region
    $region6: #{tpu_custom_call.1} parent=1 // pred_check
      _
    $region7: #{tpu_custom_call.1} parent=1 // pred_check_branch
      %14 = sbr.rel (0) target = $region9
    $region8: #{tpu_custom_call.1} parent=1 // pred_region
      _
    $region9: #{tpu_custom_call.1} parent=1 // pred_fallthru
      _
    // Predicated region
    $region10: #{tpu_custom_call.1} parent=1 // pred_check
      _
    $region11: #{tpu_custom_call.1} parent=1 // pred_check_branch
      %16 = sbr.rel (0) target = $region13
    $region12: #{tpu_custom_call.1} parent=1 // pred_region
      _
    $region13: #{tpu_custom_call.1} parent=1 // pred_fallthru
      _
    // Predicated region
    $region14: #{tpu_custom_call.1} parent=1 // pred_check
      _
    $region15: #{tpu_custom_call.1} parent=1 // pred_check_branch
      %18 = sbr.rel (0) target = $region17
    $region16: #{tpu_custom_call.1} parent=1 // pred_region
      _
    $region17: #{tpu_custom_call.1} parent=1 // pred_fallthru
      _
    // Predicated region
    $region18: #{tpu_custom_call.1} parent=1 // pred_check
      _
    $region19: #{tpu_custom_call.1} parent=1 // pred_check_branch
      %20 = sbr.rel (0) target = $region21
    $region20: #{tpu_custom_call.1} parent=1 // pred_region
      _
    $region21: #{tpu_custom_call.1} parent=1 // pred_fallthru
      _
    %v22 = vld [vmem:[%s0] sm:$0xff]
    %v23 = vpack.c.bf16 %v22, %v22
    %v24 = vld [vmem:[%s1] sm:$0xf]
    %v25 = vld [vmem:[%s1 + $0x4] sm:$0xf]
    %v26 = vld [vmem:[%s1 + $0x8] sm:$0xf]
    %v27 = vld [vmem:[%s1 + $0xc] sm:$0xf]
    %v28 = vld [vmem:[%s3] sm:$0x1]
    %v30 = vlaneseq
    %v31 = vshrl.u32 %v30, 7
    %v32 = vsub.s32 0, %v31
    %v33 = vrot.slane %v28, %v32
    %v39 = vunpack.c.l.b16 %v24
    %v40 = vunpack.c.l.b16 %v25
    %v41 = vunpack.c.l.b16 %v26
    %v42 = vunpack.c.l.b16 %v27
    %v43 = vpack.c.b16 %v40, %v39
    %v44 = vpack.c.b16 %v42, %v41
    %vm47 = vcmask 261120
    %v49 = vsel %vm47, %v23, 0
    %51 = vmatprep.subr.bf16.mxu0 0
    %52 = vmatpush1.bf16.msra.mxu0 0
    %53 = vmatprep.subr.bf16.mxu0 0
    %54 = vmatpush1.bf16.msra.mxu0 0
    %55 = vmatprep.subr.bf16.mxu0 0
    %56 = vmatpush1.bf16.msra.mxu0 0
    %57 = vmatprep.subr.bf16.mxu0 0
    %58 = vmatpush1.bf16.msra.mxu0 0
    %59 = vmatprep.subr.bf16.mxu0 0
    %60 = vmatpush1.bf16.msra.mxu0 0
    %61 = vmatprep.subr.bf16.mxu0 0
    %62 = vmatpush1.bf16.msra.mxu0 0
    %63 = vmatprep.subr.bf16.mxu0 0
    %64 = vmatpush1.bf16.msra.mxu0 %v44
    %65 = vmatprep.subr.bf16.mxu0 0
    %66 = vmatpush1.bf16.msra.mxu0 %v43
    %67 = vmatprep.subr.bf16.mxu0 0
    %68 = vmatpush2.bf16.msra.mxu0 0
    %69 = vmatprep.subr.bf16.mxu0 0
    %70 = vmatpush2.bf16.msra.mxu0 0
    %71 = vmatprep.subr.bf16.mxu0 0
    %72 = vmatpush2.bf16.msra.mxu0 0
    %73 = vmatprep.subr.bf16.mxu0 0
    %74 = vmatpush2.bf16.msra.mxu0 0
    %75 = vmatprep.subr.bf16.mxu0 0
    %76 = vmatpush2.bf16.msra.mxu0 0
    %77 = vmatprep.subr.bf16.mxu0 0
    %78 = vmatpush2.bf16.msra.mxu0 0
    %79 = vmatprep.subr.bf16.mxu0 0
    %80 = vmatpush2.bf16.msra.mxu0 0
    %81 = vmatprep.subr.bf16.mxu0 0
    %82 = vmatpush2.bf16.msra.mxu0 0
    %83 = vmatprep.mubr.bf16.mxu0 0
    %84 = vmatmul.mubr.bf16.gmra.mxu0 %v49
    %v85 = vpop.f32.mrf.mxu0
    %v86 = vadd.f32 %v33, %v85
    %v87 = vpop.f32.mrf.mxu0
    %v88 = vpop.f32.mrf.mxu0
    %v89 = vpop.f32.mrf.mxu0
    %90 = vdwg.mxu0
    %v91 = vmax.f32 %v86, 0.0
    %v92 = vpack.c.bf16 %v91, %v91
    %v93 = vld [vmem:[%s2] sm:$0xf]
    %v94 = vld [vmem:[%s2 + $0x4] sm:$0xf]
    %v95 = vld [vmem:[%s2 + $0x8] sm:$0xf]
    %v96 = vld [vmem:[%s2 + $0xc] sm:$0xf]
    %v97 = vld [vmem:[%s2 + $0x10] sm:$0xf]
    %v98 = vld [vmem:[%s2 + $0x14] sm:$0xf]
    %v99 = vld [vmem:[%s2 + $0x18] sm:$0xf]
    %v100 = vld [vmem:[%s2 + $0x1c] sm:$0xf]
    %v101 = vld [vmem:[%s4] sm:$0x1]
    %v103 = vlaneseq
    %v104 = vshrl.u32 %v103, 7
    %v105 = vsub.s32 0, %v104
    %v106 = vrot.slane %v101, %v105
    %v116 = vunpack.c.l.b16 %v93
    %v117 = vunpack.c.l.b16 %v94
    %v118 = vunpack.c.l.b16 %v95
    %v119 = vunpack.c.l.b16 %v96
    %v120 = vunpack.c.l.b16 %v97
    %v121 = vunpack.c.l.b16 %v98
    %v122 = vunpack.c.l.b16 %v99
    %v123 = vunpack.c.l.b16 %v100
    %v124 = vpack.c.b16 %v117, %v116
    %v125 = vpack.c.b16 %v119, %v118
    %v126 = vpack.c.b16 %v121, %v120
    %v127 = vpack.c.b16 %v123, %v122
    %vm132 = vcmask 523264
    %v134 = vsel %vm132, %v92, 0
    %136 = vmatprep.subr.bf16.mxu0 0
    %137 = vmatpush1.bf16.msra.mxu0 0
    %138 = vmatprep.subr.bf16.mxu0 0
    %139 = vmatpush1.bf16.msra.mxu0 0
    %140 = vmatprep.subr.bf16.mxu0 0
    %141 = vmatpush1.bf16.msra.mxu0 0
    %142 = vmatprep.subr.bf16.mxu0 0
    %143 = vmatpush1.bf16.msra.mxu0 0
    %144 = vmatprep.subr.bf16.mxu0 0
    %145 = vmatpush1.bf16.msra.mxu0 %v127
    %146 = vmatprep.subr.bf16.mxu0 0
    %147 = vmatpush1.bf16.msra.mxu0 %v126
    %148 = vmatprep.subr.bf16.mxu0 0
    %149 = vmatpush1.bf16.msra.mxu0 %v125
    %150 = vmatprep.subr.bf16.mxu0 0
    %151 = vmatpush1.bf16.msra.mxu0 %v124
    %152 = vmatprep.subr.bf16.mxu0 0
    %153 = vmatpush2.bf16.msra.mxu0 0
    %154 = vmatprep.subr.bf16.mxu0 0
    %155 = vmatpush2.bf16.msra.mxu0 0
    %156 = vmatprep.subr.bf16.mxu0 0
    %157 = vmatpush2.bf16.msra.mxu0 0
    %158 = vmatprep.subr.bf16.mxu0 0
    %159 = vmatpush2.bf16.msra.mxu0 0
    %160 = vmatprep.subr.bf16.mxu0 0
    %161 = vmatpush2.bf16.msra.mxu0 0
    %162 = vmatprep.subr.bf16.mxu0 0
    %163 = vmatpush2.bf16.msra.mxu0 0
    %164 = vmatprep.subr.bf16.mxu0 0
    %165 = vmatpush2.bf16.msra.mxu0 0
    %166 = vmatprep.subr.bf16.mxu0 0
    %167 = vmatpush2.bf16.msra.mxu0 0
    %168 = vmatprep.mubr.bf16.mxu0 0
    %169 = vmatmul.mubr.bf16.gmra.mxu0 %v134
    %v170 = vpop.f32.mrf.mxu0
    %v171 = vadd.f32 %v106, %v170
    %v172 = vpop.f32.mrf.mxu0
    %v173 = vpop.f32.mrf.mxu0
    %v174 = vpop.f32.mrf.mxu0
    %175 = vdwg.mxu0
    %v176 = vpack.c.bf16 %v171, %v171
    %vm177 = vcmask 125952
    %178 = vst.msk [vmem:[#allocation2] sm:$0xf] %vm177, %v176
    // Predicated region
    $region22: #{tpu_custom_call.1} parent=1 // pred_check
      _
    $region23: #{tpu_custom_call.1} parent=1 // pred_check_branch
      %180 = sbr.rel (0) target = $region25
    $region24: #{tpu_custom_call.1} parent=1 // pred_region
      %s182 = ssub.s32 64, 64
      %183 = vsyncadd [#allocation3], %s182
      %s185 = sshll.u32 [#allocation2], 4
      %s186 = int_to_ptr.vmem [resolvable:$true] %s185
      %188 = dma.vmem_to_hbm [thread:$0]  %s186, 64, %s5, [#allocation3]
    $region25: #{tpu_custom_call.1} parent=1 // pred_fallthru
      _
    // Predicated region
    $region26: #{tpu_custom_call.1} parent=1 // pred_check
      _
    $region27: #{tpu_custom_call.1} parent=1 // pred_check_branch
      %190 = sbr.rel (0) target = $region29
    $region28: #{tpu_custom_call.1} parent=1 // pred_region
      %191 = dma.done [#allocation3], 64
    $region29: #{tpu_custom_call.1} parent=1 // pred_fallthru
      _
    %192 = vsyncpa [#allocation3], 1

</llo_original>
